<compile_context>
chip_gen: v6e
topology: v6e:2x2x1
jax: 0.10.0
libtpu: 0.0.40
codegen_flags: <defaults>
</compile_context>

<pallas_src>
import jax
import jax.numpy as jnp
from jax.experimental import pallas as pl
from jax.experimental.pallas import tpu as pltpu


def _asp_kernel(feat_ref, mask_ref, wl_ref, bl_ref, wa_ref, ba_ref, wv_ref,
                out_ref):
    # feat_ref: [Bb, T, Hin] (native dtype)   mask_ref: [Bb, T, 1] f32
    # wl: [Hin, D]  bl: [1, D]  wa: [D, D]  ba: [1, D]  wv: [1, D]
    # out_ref: [Bb, 2, D]  (row 0 = attentive mean, row 1 = attentive std)
    bb, t, hin = feat_ref.shape
    d = wl_ref.shape[1]

    # Flatten the batch block so both GEMMs see M = Bb*T rows (better MXU fill).
    f = feat_ref[...].reshape(bb * t, hin)                 # native dtype, no upcast

    # Projection (self.linear) on the MXU, f32 accumulation.
    x = jnp.dot(f, wl_ref[...], preferred_element_type=jnp.float32)       # [Bb*T, D]
    x = x + bl_ref[...]

    # Attention MLP hidden layer: ReLU(W_a(x)).
    a = jnp.dot(x, wa_ref[...], preferred_element_type=jnp.float32) + ba_ref[...]
    a = jnp.maximum(a, 0.0)                                               # [Bb*T, D]

    # Attention head W(.): 1-wide output -> VPU multiply + lane reduce, not MXU.
    # (The head bias bw is omitted: softmax over T cancels a constant shift.)
    logits = jnp.sum(a * wv_ref[...], axis=-1, keepdims=True)             # [Bb*T, 1]
    logits = logits.reshape(bb, t, 1) + mask_ref[...]                     # [Bb, T, 1]

    # Softmax over time (axis 1), per batch row in the block.
    m = jnp.max(logits, axis=1, keepdims=True)                            # [Bb, 1, 1]
    e = jnp.exp(logits - m)                                               # [Bb, T, 1]
    denom = jnp.sum(e, axis=1, keepdims=True)                             # [Bb, 1, 1]
    att = e * pl.reciprocal(denom, approx=True)                           # [Bb, T, 1]

    # Attention-weighted first / second moments over time.
    x3 = x.reshape(bb, t, d)                                              # [Bb, T, D]
    wx = att * x3
    sap = jnp.sum(wx, axis=1, keepdims=True)                              # [Bb, 1, D]
    m2 = jnp.sum(wx * x3, axis=1, keepdims=True)                          # [Bb, 1, D]
    std = jnp.sqrt(m2 - sap * sap + 1e-8)                                 # [Bb, 1, D]

    out_ref[...] = jnp.concatenate([sap, std], axis=1).astype(out_ref.dtype)


def asp_forward(feature_BxTxH, att_mask_BxT, params, *, block_b=8):
    """ASP forward.

    feature: [B, T, Hin] (any float dtype - bf16 recommended for the MXU path),
    att_mask: [B, T] additive logits. Returns [B, 2*D] float32.
    """
    B, T, Hin = feature_BxTxH.shape
    wl = params["wl"]                             # [Hin, D], storage dtype
    D = wl.shape[1]
    bl = params["bl"].reshape(1, D)
    wa = params["wa"]                             # [D, D]
    ba = params["ba"].reshape(1, D)
    wv = params["wv"].reshape(1, D)               # attention head as a lane row
    # params["bw"] intentionally unused (softmax-invariant constant shift).

    mask = att_mask_BxT.astype(jnp.float32).reshape(B, T, 1)

    # Block several batch rows per grid step; pad B up to a multiple of the block.
    bb = max(1, min(block_b, B))
    B_pad = ((B + bb - 1) // bb) * bb
    feat = feature_BxTxH
    if B_pad != B:
        feat = jnp.pad(feat, ((0, B_pad - B), (0, 0), (0, 0)))
        mask = jnp.pad(mask, ((0, B_pad - B), (0, 0), (0, 0)))

    out = pl.pallas_call(
        _asp_kernel,
        out_shape=jax.ShapeDtypeStruct((B_pad, 2, D), jnp.float32),
        grid_spec=pltpu.PrefetchScalarGridSpec(
            num_scalar_prefetch=0,
            grid=(B_pad // bb,),
            in_specs=[
                pl.BlockSpec((bb, T, Hin), lambda b: (b, 0, 0)),  # feature (native dtype)
                pl.BlockSpec((bb, T, 1), lambda b: (b, 0, 0)),    # att mask logits
                pl.BlockSpec((Hin, D), lambda b: (0, 0)),         # W_linear (resident)
                pl.BlockSpec((1, D), lambda b: (0, 0)),           # b_linear
                pl.BlockSpec((D, D), lambda b: (0, 0)),           # W_a
                pl.BlockSpec((1, D), lambda b: (0, 0)),           # b_a
                pl.BlockSpec((1, D), lambda b: (0, 0)),           # W (attention head row)
            ],
            out_specs=pl.BlockSpec((bb, 2, D), lambda b: (b, 0, 0)),
        ),
        compiler_params=pltpu.CompilerParams(dimension_semantics=("parallel",)),
    )(feat, mask, wl, bl, wa, ba, wv)
    return out.reshape(B_pad, 2 * D)[:B]


def _reference(feature, mask, params):
    """Pure-JAX reference mirroring the PyTorch ASP forward (includes bw)."""
    hp = jax.lax.Precision.HIGHEST
    D = params["wl"].shape[1]
    x = jnp.dot(feature.astype(jnp.float32), params["wl"].astype(jnp.float32),
                precision=hp) + params["bl"].astype(jnp.float32)
    a = jax.nn.relu(jnp.dot(x, params["wa"].astype(jnp.float32), precision=hp)
                    + params["ba"].astype(jnp.float32))
    logits = jnp.dot(a, params["wv"].astype(jnp.float32).reshape(D, 1),
                     precision=hp)[..., 0] + params["bw"].astype(jnp.float32)
    logits = mask.astype(jnp.float32) + logits
    att = jax.nn.softmax(logits, axis=-1)[..., None]           # [B, T, 1]
    sap = jnp.sum(att * x, axis=1)                             # [B, D]
    std = jnp.sqrt(jnp.sum(att * x * x, axis=1) - sap ** 2 + 1e-8)
    return jnp.concatenate([sap, std], axis=-1)


if __name__ == "__main__":
    B, T, Hin, D = 2, 8, 32, 32
    key = jax.random.PRNGKey(0)
    k1, k2, k3, k4, k5, k6, k7 = jax.random.split(key, 7)

    feature = jax.random.normal(k1, (B, T, Hin), dtype=jnp.float32)

    # Attention-mask logits: 0 for valid frames, large negative for padded frames.
    mask = jnp.zeros((B, T), dtype=jnp.float32)
    mask = mask.at[1, 5:].set(-1e4)

    params = {
        "wl": jax.random.normal(k2, (Hin, D), jnp.float32) * (1.0 / Hin ** 0.5),
        "bl": jax.random.normal(k3, (D,), jnp.float32) * 0.1,
        "wa": jax.random.normal(k4, (D, D), jnp.float32) * (1.0 / D ** 0.5),
        "ba": jax.random.normal(k5, (D,), jnp.float32) * 0.1,
        "wv": jax.random.normal(k6, (D,), jnp.float32) * (1.0 / D ** 0.5),
        "bw": jax.random.normal(k7, (), jnp.float32) * 0.1,
    }

    out = asp_forward(feature, mask, params)
    out = jax.block_until_ready(out)

    ref = _reference(feature, mask, params)
    assert out.shape == (B, 2 * D), out.shape
    # Loose-ish tolerance: kernel matmuls run with the MXU's default f32 pass
    # scheme (and an EUP approximate reciprocal), the reference uses HIGHEST.
    assert jnp.allclose(out, ref, atol=2e-2, rtol=2e-2), (out, ref)

    print("KERNEL_OK")
</pallas_src>

<mosaic_0001>
module attributes {stable_mosaic.version = 11 : i64} {
  func.func @_asp_kernel(%arg0: i32, %arg1: memref<2x8x32xf32, #tpu.memory_space<vmem>>, %arg2: memref<2x8x1xf32, #tpu.memory_space<vmem>>, %arg3: memref<32x32xf32, #tpu.memory_space<vmem>>, %arg4: memref<1x32xf32, #tpu.memory_space<vmem>>, %arg5: memref<32x32xf32, #tpu.memory_space<vmem>>, %arg6: memref<1x32xf32, #tpu.memory_space<vmem>>, %arg7: memref<1x32xf32, #tpu.memory_space<vmem>>, %arg8: memref<2x2x32xf32, #tpu.memory_space<vmem>>) attributes {dimension_semantics = [#tpu.dimension_semantics<parallel>], iteration_bounds = array<i64: 1>, scalar_prefetch = 0 : i64, scratch_operands = 0 : i64, tpu.core_type = #tpu.core_type<tc>, window_params = [{transform_indices = @transform_0, window_bounds = array<i64: 2, 8, 32>}, {transform_indices = @transform_1, window_bounds = array<i64: 2, 8, 1>}, {pipeline_mode = #tpu.pipeline_mode<synchronous>, transform_indices = @transform_2, window_bounds = array<i64: 32, 32>}, {pipeline_mode = #tpu.pipeline_mode<synchronous>, transform_indices = @transform_3, window_bounds = array<i64: 1, 32>}, {pipeline_mode = #tpu.pipeline_mode<synchronous>, transform_indices = @transform_4, window_bounds = array<i64: 32, 32>}, {pipeline_mode = #tpu.pipeline_mode<synchronous>, transform_indices = @transform_5, window_bounds = array<i64: 1, 32>}, {pipeline_mode = #tpu.pipeline_mode<synchronous>, transform_indices = @transform_6, window_bounds = array<i64: 1, 32>}, {transform_indices = @transform_7, window_bounds = array<i64: 2, 2, 32>}]} {
    %c0 = arith.constant 0 : index
    %c0_0 = arith.constant 0 : index
    %c0_1 = arith.constant 0 : index
    %0 = vector.load %arg1[%c0, %c0_0, %c0_1] : memref<2x8x32xf32, #tpu.memory_space<vmem>>, vector<2x8x32xf32>
    %1 = vector.shape_cast %0 : vector<2x8x32xf32> to vector<16x32xf32>
    %c0_2 = arith.constant 0 : index
    %c0_3 = arith.constant 0 : index
    %2 = vector.load %arg3[%c0_2, %c0_3] : memref<32x32xf32, #tpu.memory_space<vmem>>, vector<32x32xf32>
    %cst = arith.constant dense<0.000000e+00> : vector<16x32xf32>
    %3 = tpu.matmul %1, %2, %cst {dimension_numbers = #tpu.dot_dimension_numbers<[1], [0], [0], [1], [0, 0, 1, 1], [], []>} : vector<16x32xf32>, vector<32x32xf32>, vector<16x32xf32> -> vector<16x32xf32>
    %c0_4 = arith.constant 0 : index
    %c0_5 = arith.constant 0 : index
    %4 = vector.load %arg4[%c0_4, %c0_5] : memref<1x32xf32, #tpu.memory_space<vmem>>, vector<1x32xf32>
    %5 = vector.broadcast %4 : vector<1x32xf32> to vector<16x32xf32>
    %6 = arith.addf %3, %5 : vector<16x32xf32>
    %c0_6 = arith.constant 0 : index
    %c0_7 = arith.constant 0 : index
    %7 = vector.load %arg5[%c0_6, %c0_7] : memref<32x32xf32, #tpu.memory_space<vmem>>, vector<32x32xf32>
    %cst_8 = arith.constant dense<0.000000e+00> : vector<16x32xf32>
    %8 = tpu.matmul %6, %7, %cst_8 {dimension_numbers = #tpu.dot_dimension_numbers<[1], [0], [0], [1], [0, 0, 1, 1], [], []>} : vector<16x32xf32>, vector<32x32xf32>, vector<16x32xf32> -> vector<16x32xf32>
    %c0_9 = arith.constant 0 : index
    %c0_10 = arith.constant 0 : index
    %9 = vector.load %arg6[%c0_9, %c0_10] : memref<1x32xf32, #tpu.memory_space<vmem>>, vector<1x32xf32>
    %10 = vector.broadcast %9 : vector<1x32xf32> to vector<16x32xf32>
    %11 = arith.addf %8, %10 : vector<16x32xf32>
    %cst_11 = arith.constant 0.000000e+00 : f32
    %12 = vector.broadcast %cst_11 : f32 to vector<16x32xf32>
    %13 = arith.maximumf %11, %12 : vector<16x32xf32>
    %c0_12 = arith.constant 0 : index
    %c0_13 = arith.constant 0 : index
    %14 = vector.load %arg7[%c0_12, %c0_13] : memref<1x32xf32, #tpu.memory_space<vmem>>, vector<1x32xf32>
    %15 = vector.broadcast %14 : vector<1x32xf32> to vector<16x32xf32>
    %16 = arith.mulf %13, %15 : vector<16x32xf32>
    %cst_14 = arith.constant dense<0.000000e+00> : vector<16xf32>
    %17 = vector.multi_reduction <add>, %16, %cst_14 [1] : vector<16x32xf32> to vector<16xf32>
    %18 = vector.shape_cast %17 : vector<16xf32> to vector<16x1xf32>
    %19 = vector.shape_cast %18 : vector<16x1xf32> to vector<2x8x1xf32>
    %c0_15 = arith.constant 0 : index
    %c0_16 = arith.constant 0 : index
    %c0_17 = arith.constant 0 : index
    %20 = vector.load %arg2[%c0_15, %c0_16, %c0_17] : memref<2x8x1xf32, #tpu.memory_space<vmem>>, vector<2x8x1xf32>
    %21 = arith.addf %19, %20 : vector<2x8x1xf32>
    %cst_18 = arith.constant dense<0xFF800000> : vector<2x1xf32>
    %22 = vector.multi_reduction <maximumf>, %21, %cst_18 [1] : vector<2x8x1xf32> to vector<2x1xf32>
    %23 = vector.shape_cast %22 : vector<2x1xf32> to vector<2x1x1xf32>
    %24 = vector.broadcast %23 : vector<2x1x1xf32> to vector<2x8x1xf32>
    %25 = arith.subf %21, %24 : vector<2x8x1xf32>
    %26 = math.exp %25 : vector<2x8x1xf32>
    %cst_19 = arith.constant dense<0.000000e+00> : vector<2x1xf32>
    %27 = vector.multi_reduction <add>, %26, %cst_19 [1] : vector<2x8x1xf32> to vector<2x1xf32>
    %28 = vector.shape_cast %27 : vector<2x1xf32> to vector<2x1x1xf32>
    %29 = tpu.reciprocal %28 {approx = true} : vector<2x1x1xf32> -> vector<2x1x1xf32>
    %30 = vector.broadcast %29 : vector<2x1x1xf32> to vector<2x8x1xf32>
    %31 = arith.mulf %26, %30 : vector<2x8x1xf32>
    %32 = vector.shape_cast %6 : vector<16x32xf32> to vector<2x8x32xf32>
    %33 = vector.broadcast %31 : vector<2x8x1xf32> to vector<2x8x32xf32>
    %34 = arith.mulf %33, %32 : vector<2x8x32xf32>
    %cst_20 = arith.constant dense<0.000000e+00> : vector<2x32xf32>
    %35 = vector.multi_reduction <add>, %34, %cst_20 [1] : vector<2x8x32xf32> to vector<2x32xf32>
    %36 = vector.shape_cast %35 : vector<2x32xf32> to vector<2x1x32xf32>
    %37 = arith.mulf %34, %32 : vector<2x8x32xf32>
    %cst_21 = arith.constant dense<0.000000e+00> : vector<2x32xf32>
    %38 = vector.multi_reduction <add>, %37, %cst_21 [1] : vector<2x8x32xf32> to vector<2x32xf32>
    %39 = vector.shape_cast %38 : vector<2x32xf32> to vector<2x1x32xf32>
    %40 = arith.mulf %36, %36 : vector<2x1x32xf32>
    %41 = arith.subf %39, %40 : vector<2x1x32xf32>
    %cst_22 = arith.constant 9.99999993E-9 : f32
    %42 = vector.broadcast %cst_22 : f32 to vector<2x1x32xf32>
    %43 = arith.addf %41, %42 : vector<2x1x32xf32>
    %44 = math.sqrt %43 : vector<2x1x32xf32>
    %45 = tpu.concatenate %36, %44 in 1 : vector<2x1x32xf32>, vector<2x1x32xf32> -> vector<2x2x32xf32>
    %c0_23 = arith.constant 0 : index
    %c0_24 = arith.constant 0 : index
    %c0_25 = arith.constant 0 : index
    %46 = vector.load %arg8[%c0_23, %c0_24, %c0_25] : memref<2x2x32xf32, #tpu.memory_space<vmem>>, vector<2x2x32xf32>
    tpu.vector_store %arg8[%c0_23, %c0_24, %c0_25], %45 {strides = array<i32>} : memref<2x2x32xf32, #tpu.memory_space<vmem>>, vector<2x2x32xf32>,
    return
  }
  func.func @transform_0(%arg0: i32) -> (i32, i32, i32) {
    %c0_i32 = arith.constant 0 : i32
    %c0_i32_0 = arith.constant 0 : i32
    %c0_i32_1 = arith.constant 0 : i32
    return %arg0, %c0_i32, %c0_i32_0 : i32, i32, i32
  }
  func.func @transform_1(%arg0: i32) -> (i32, i32, i32) {
    %c0_i32 = arith.constant 0 : i32
    %c0_i32_0 = arith.constant 0 : i32
    %c0_i32_1 = arith.constant 0 : i32
    return %arg0, %c0_i32, %c0_i32_0 : i32, i32, i32
  }
  func.func @transform_2(%arg0: i32) -> (i32, i32) {
    %c0_i32 = arith.constant 0 : i32
    %c0_i32_0 = arith.constant 0 : i32
    %c0_i32_1 = arith.constant 0 : i32
    return %c0_i32, %c0_i32_0 : i32, i32
  }
  func.func @transform_3(%arg0: i32) -> (i32, i32) {
    %c0_i32 = arith.constant 0 : i32
    %c0_i32_0 = arith.constant 0 : i32
    %c0_i32_1 = arith.constant 0 : i32
    return %c0_i32, %c0_i32_0 : i32, i32
  }
  func.func @transform_4(%arg0: i32) -> (i32, i32) {
    %c0_i32 = arith.constant 0 : i32
    %c0_i32_0 = arith.constant 0 : i32
    %c0_i32_1 = arith.constant 0 : i32
    return %c0_i32, %c0_i32_0 : i32, i32
  }
  func.func @transform_5(%arg0: i32) -> (i32, i32) {
    %c0_i32 = arith.constant 0 : i32
    %c0_i32_0 = arith.constant 0 : i32
    %c0_i32_1 = arith.constant 0 : i32
    return %c0_i32, %c0_i32_0 : i32, i32
  }
  func.func @transform_6(%arg0: i32) -> (i32, i32) {
    %c0_i32 = arith.constant 0 : i32
    %c0_i32_0 = arith.constant 0 : i32
    %c0_i32_1 = arith.constant 0 : i32
    return %c0_i32, %c0_i32_0 : i32, i32
  }
  func.func @transform_7(%arg0: i32) -> (i32, i32, i32) {
    %c0_i32 = arith.constant 0 : i32
    %c0_i32_0 = arith.constant 0 : i32
    %c0_i32_1 = arith.constant 0 : i32
    return %arg0, %c0_i32, %c0_i32_0 : i32, i32, i32
  }
}

</mosaic_0001>

<llo_original>
// kernel: tpu_custom_call.1
$region0: #{tpu_custom_call.1}
  #allocation0 [shape = 'u32[]', space=smem, size = 0x4, offset = 0x4, fixed_abs, tag = 'smem constant byte address 0x4 - core index']
  #allocation1 [shape = 'u32[144,128]{1,0:T(1,128)}', space=vmem, size = 0x12000, scoped, tag = 'internal scratch']
  %s0 = inlined_call_operand.vmem [shape: f32[2,8,32], index: 0, kind: input, shape index: {}]
  %s1 = inlined_call_operand.vmem [shape: f32[2,8,1], index: 1, kind: input, shape index: {}]
  %s2 = inlined_call_operand.hbm [shape: f32[32,32], index: 2, kind: input, shape index: {}]
  %s3 = inlined_call_operand.vmem [shape: f32[1,32], index: 3, kind: input, shape index: {}]
  %s4 = inlined_call_operand.hbm [shape: f32[32,32], index: 4, kind: input, shape index: {}]
  %s5 = inlined_call_operand.vmem [shape: f32[1,32], index: 5, kind: input, shape index: {}]
  %s6 = inlined_call_operand.vmem [shape: f32[1,32], index: 6, kind: input, shape index: {}]
  %s7 = inlined_call_operand.hbm [shape: f32[2,2,32], index: 7, kind: output, shape index: {}]
  %s8 = sld [smem:[#allocation0]]
  $region46: #{tpu_custom_call.1} parent=0
    _
  %s10 = ssub.s32 1, %s8
  %s11 = scalar_select 0, %s10, %s8
  $region1: #{tpu_custom_call.1} parent=0
    #allocation2 [shape = 'u8[16384]{0}', space=vmem, size = 0x4000, scoped, tag = 'input window, operand 2, single buffered']
    #allocation3 [shape = 's32[1]{0}', space=sflag, size = 0x4, scoped, tag = 'scoped memory for tpu_custom_call.1']
    #allocation4 [shape = 's32[1]{0}', space=sflag, size = 0x4, scoped, tag = 'scoped memory for tpu_custom_call.1']
    #allocation5 [shape = 'u8[16384]{0}', space=vmem, size = 0x4000, scoped, tag = 'input window, operand 4, single buffered']
    #allocation6 [shape = 's32[1]{0}', space=sflag, size = 0x4, scoped, tag = 'scoped memory for tpu_custom_call.1']
    #allocation7 [shape = 'u8[2048]{0}', space=vmem, size = 0x800, scoped, tag = 'output window, operand 0, single buffered']
    %12 = vsyncpa [#allocation3], 0
    %13 = vsyncpa [#allocation6], 0
    %14 = vsyncpa [#allocation4], 0
    // Predicated region
    $region2: #{tpu_custom_call.1} parent=1 // pred_check
      _
    $region3: #{tpu_custom_call.1} parent=1 // pred_check_branch
      %16 = sbr.rel (0) target = $region5
    $region4: #{tpu_custom_call.1} parent=1 // pred_region
      _
    $region5: #{tpu_custom_call.1} parent=1 // pred_fallthru
      _
    // Predicated region
    $region6: #{tpu_custom_call.1} parent=1 // pred_check
      _
    $region7: #{tpu_custom_call.1} parent=1 // pred_check_branch
      %18 = sbr.rel (0) target = $region9
    $region8: #{tpu_custom_call.1} parent=1 // pred_region
      _
    $region9: #{tpu_custom_call.1} parent=1 // pred_fallthru
      _
    // Predicated region
    $region10: #{tpu_custom_call.1} parent=1 // pred_check
      _
    $region11: #{tpu_custom_call.1} parent=1 // pred_check_branch
      %20 = sbr.rel (0) target = $region13
    $region12: #{tpu_custom_call.1} parent=1 // pred_region
      %s22 = ssub.s32 512, 512
      %23 = vsyncadd [#allocation3], %s22
      %s24 = sshll.u32 [#allocation2], 4
      %s25 = int_to_ptr.vmem [resolvable:$true] %s24
      %30 = dma.hbm_to_vmem [thread:$0]  %s2, 512, %s25, [#allocation3], 128, 128, 8
    $region13: #{tpu_custom_call.1} parent=1 // pred_fallthru
      _
    // Predicated region
    $region14: #{tpu_custom_call.1} parent=1 // pred_check
      _
    $region15: #{tpu_custom_call.1} parent=1 // pred_check_branch
      %32 = sbr.rel (0) target = $region17
    $region16: #{tpu_custom_call.1} parent=1 // pred_region
      _
    $region17: #{tpu_custom_call.1} parent=1 // pred_fallthru
      _
    // Predicated region
    $region18: #{tpu_custom_call.1} parent=1 // pred_check
      _
    $region19: #{tpu_custom_call.1} parent=1 // pred_check_branch
      %34 = sbr.rel (0) target = $region21
    $region20: #{tpu_custom_call.1} parent=1 // pred_region
      %s36 = ssub.s32 512, 512
      %37 = vsyncadd [#allocation6], %s36
      %s38 = sshll.u32 [#allocation5], 4
      %s39 = int_to_ptr.vmem [resolvable:$true] %s38
      %44 = dma.hbm_to_vmem [thread:$0]  %s4, 512, %s39, [#allocation6], 128, 128, 8
    $region21: #{tpu_custom_call.1} parent=1 // pred_fallthru
      _
    // Predicated region
    $region22: #{tpu_custom_call.1} parent=1 // pred_check
      _
    $region23: #{tpu_custom_call.1} parent=1 // pred_check_branch
      %46 = sbr.rel (0) target = $region25
    $region24: #{tpu_custom_call.1} parent=1 // pred_region
      _
    $region25: #{tpu_custom_call.1} parent=1 // pred_fallthru
      _
    // Predicated region
    $region26: #{tpu_custom_call.1} parent=1 // pred_check
      _
    $region27: #{tpu_custom_call.1} parent=1 // pred_check_branch
      %48 = sbr.rel (0) target = $region29
    $region28: #{tpu_custom_call.1} parent=1 // pred_region
      _
    $region29: #{tpu_custom_call.1} parent=1 // pred_fallthru
      _
    // Predicated region
    $region30: #{tpu_custom_call.1} parent=1 // pred_check
      _
    $region31: #{tpu_custom_call.1} parent=1 // pred_check_branch
      %50 = sbr.rel (0) target = $region33
    $region32: #{tpu_custom_call.1} parent=1 // pred_region
      %51 = dma.done [#allocation3], 512
    $region33: #{tpu_custom_call.1} parent=1 // pred_fallthru
      _
    // Predicated region
    $region34: #{tpu_custom_call.1} parent=1 // pred_check
      _
    $region35: #{tpu_custom_call.1} parent=1 // pred_check_branch
      %53 = sbr.rel (0) target = $region37
    $region36: #{tpu_custom_call.1} parent=1 // pred_region
      %54 = dma.done [#allocation6], 512
    $region37: #{tpu_custom_call.1} parent=1 // pred_fallthru
      _
    %v55 = vld [vmem:[%s0] sm:$0xff]
    %v56 = vld [vmem:[%s0 + $0x8] sm:$0xff]
    %v57 = vld [vmem:[#allocation2] sm:$0xff]
    %v58 = vld [vmem:[#allocation2 + $0x8] sm:$0xff]
    %v59 = vld [vmem:[#allocation2 + $0x10] sm:$0xff]
    %v60 = vld [vmem:[#allocation2 + $0x18] sm:$0xff]
    %v61 = vld [vmem:[%s3] sm:$0x1]
    %v63 = vlaneseq
    %v64 = vshrl.u32 %v63, 7
    %v65 = vsub.s32 0, %v64
    %v66 = vrot.slane %v61, %v65
    %vm68 = vcmask 261120
    %v70 = vsel %vm68, %v55, 0
    %v73 = vsel %vm68, %v56, 0
    %75 = vmatprep.subr.mxu0 0.0
    %76 = vmatpush1.msra.mxu0 0.0
    %77 = vmatprep.subr.mxu0 0.0
    %78 = vmatpush1.msra.mxu0 0.0
    %79 = vmatprep.subr.mxu0 0.0
    %80 = vmatpush1.msra.mxu0 0.0
    %81 = vmatprep.subr.mxu0 0.0
    %82 = vmatpush1.msra.mxu0 0.0
    %83 = vmatprep.subr.mxu0 0.0
    %84 = vmatpush1.msra.mxu0 0.0
    %85 = vmatprep.subr.mxu0 0.0
    %86 = vmatpush1.msra.mxu0 0.0
    %87 = vmatprep.subr.mxu0 0.0
    %88 = vmatpush1.msra.mxu0 0.0
    %89 = vmatprep.subr.mxu0 0.0
    %90 = vmatpush1.msra.mxu0 0.0
    %91 = vmatprep.subr.mxu0 0.0
    %92 = vmatpush1.msra.mxu0 0.0
    %93 = vmatprep.subr.mxu0 0.0
    %94 = vmatpush1.msra.mxu0 0.0
    %95 = vmatprep.subr.mxu0 0.0
    %96 = vmatpush1.msra.mxu0 0.0
    %97 = vmatprep.subr.mxu0 0.0
    %98 = vmatpush1.msra.mxu0 0.0
    %99 = vmatprep.subr.mxu0 0.0
    %100 = vmatpush1.msra.mxu0 %v60
    %101 = vmatprep.subr.mxu0 0.0
    %102 = vmatpush1.msra.mxu0 %v59
    %103 = vmatprep.subr.mxu0 0.0
    %104 = vmatpush1.msra.mxu0 %v58
    %105 = vmatprep.subr.mxu0 0.0
    %106 = vmatpush1.msra.mxu0 %v57
    %107 = vmatprep.subr.mxu0 0.0
    %108 = vmatpush2.msra.mxu0 0.0
    %109 = vmatprep.subr.mxu0 0.0
    %110 = vmatpush2.msra.mxu0 0.0
    %111 = vmatprep.subr.mxu0 0.0
    %112 = vmatpush2.msra.mxu0 0.0
    %113 = vmatprep.subr.mxu0 0.0
    %114 = vmatpush2.msra.mxu0 0.0
    %115 = vmatprep.subr.mxu0 0.0
    %116 = vmatpush2.msra.mxu0 0.0
    %117 = vmatprep.subr.mxu0 0.0
    %118 = vmatpush2.msra.mxu0 0.0
    %119 = vmatprep.subr.mxu0 0.0
    %120 = vmatpush2.msra.mxu0 0.0
    %121 = vmatprep.subr.mxu0 0.0
    %122 = vmatpush2.msra.mxu0 0.0
    %123 = vmatprep.subr.mxu0 0.0
    %124 = vmatpush2.msra.mxu0 0.0
    %125 = vmatprep.subr.mxu0 0.0
    %126 = vmatpush2.msra.mxu0 0.0
    %127 = vmatprep.subr.mxu0 0.0
    %128 = vmatpush2.msra.mxu0 0.0
    %129 = vmatprep.subr.mxu0 0.0
    %130 = vmatpush2.msra.mxu0 0.0
    %131 = vmatprep.subr.mxu0 0.0
    %132 = vmatpush2.msra.mxu0 0.0
    %133 = vmatprep.subr.mxu0 0.0
    %134 = vmatpush2.msra.mxu0 0.0
    %135 = vmatprep.subr.mxu0 0.0
    %136 = vmatpush2.msra.mxu0 0.0
    %137 = vmatprep.subr.mxu0 0.0
    %138 = vmatpush2.msra.mxu0 0.0
    %139 = vmatprep.mubr.f32.mxu0 0.0
    %140 = vmatmul.mubr.f32.gmra.mxu0 %v70
    %v141 = vpop.f32.mrf.mxu0
    %v142 = vadd.f32 %v66, %v141
    %v143 = vpop.f32.mrf.mxu0
    %144 = vmatprep.mubr.f32.mxu0 0.0
    %145 = vmatmul.mubr.f32.gmra.mxu0 %v73
    %v146 = vpop.f32.mrf.mxu0
    %v147 = vadd.f32 %v66, %v146
    %v148 = vpop.f32.mrf.mxu0
    %149 = vdwg.mxu0
    %v150 = vld [vmem:[#allocation5] sm:$0xff]
    %v151 = vld [vmem:[#allocation5 + $0x8] sm:$0xff]
    %v152 = vld [vmem:[#allocation5 + $0x10] sm:$0xff]
    %v153 = vld [vmem:[#allocation5 + $0x18] sm:$0xff]
    %v154 = vld [vmem:[%s5] sm:$0x1]
    %v156 = vlaneseq
    %v157 = vshrl.u32 %v156, 7
    %v158 = vsub.s32 0, %v157
    %v159 = vrot.slane %v154, %v158
    %v162 = vsel %vm68, %v142, 0
    %v165 = vsel %vm68, %v147, 0
    %167 = vmatprep.subr.mxu0 0.0
    %168 = vmatpush1.msra.mxu0 0.0
    %169 = vmatprep.subr.mxu0 0.0
    %170 = vmatpush1.msra.mxu0 0.0
    %171 = vmatprep.subr.mxu0 0.0
    %172 = vmatpush1.msra.mxu0 0.0
    %173 = vmatprep.subr.mxu0 0.0
    %174 = vmatpush1.msra.mxu0 0.0
    %175 = vmatprep.subr.mxu0 0.0
    %176 = vmatpush1.msra.mxu0 0.0
    %177 = vmatprep.subr.mxu0 0.0
    %178 = vmatpush1.msra.mxu0 0.0
    %179 = vmatprep.subr.mxu0 0.0
    %180 = vmatpush1.msra.mxu0 0.0
    %181 = vmatprep.subr.mxu0 0.0
    %182 = vmatpush1.msra.mxu0 0.0
    %183 = vmatprep.subr.mxu0 0.0
    %184 = vmatpush1.msra.mxu0 0.0
    %185 = vmatprep.subr.mxu0 0.0
    %186 = vmatpush1.msra.mxu0 0.0
    %187 = vmatprep.subr.mxu0 0.0
    %188 = vmatpush1.msra.mxu0 0.0
    %189 = vmatprep.subr.mxu0 0.0
    %190 = vmatpush1.msra.mxu0 0.0
    %191 = vmatprep.subr.mxu0 0.0
    %192 = vmatpush1.msra.mxu0 %v153
    %193 = vmatprep.subr.mxu0 0.0
    %194 = vmatpush1.msra.mxu0 %v152
    %195 = vmatprep.subr.mxu0 0.0
    %196 = vmatpush1.msra.mxu0 %v151
    %197 = vmatprep.subr.mxu0 0.0
    %198 = vmatpush1.msra.mxu0 %v150
    %199 = vmatprep.subr.mxu0 0.0
    %200 = vmatpush2.msra.mxu0 0.0
    %201 = vmatprep.subr.mxu0 0.0
    %202 = vmatpush2.msra.mxu0 0.0
    %203 = vmatprep.subr.mxu0 0.0
    %204 = vmatpush2.msra.mxu0 0.0
    %205 = vmatprep.subr.mxu0 0.0
    %206 = vmatpush2.msra.mxu0 0.0
    %207 = vmatprep.subr.mxu0 0.0
    %208 = vmatpush2.msra.mxu0 0.0
    %209 = vmatprep.subr.mxu0 0.0
    %210 = vmatpush2.msra.mxu0 0.0
    %211 = vmatprep.subr.mxu0 0.0
    %212 = vmatpush2.msra.mxu0 0.0
    %213 = vmatprep.subr.mxu0 0.0
    %214 = vmatpush2.msra.mxu0 0.0
    %215 = vmatprep.subr.mxu0 0.0
    %216 = vmatpush2.msra.mxu0 0.0
    %217 = vmatprep.subr.mxu0 0.0
    %218 = vmatpush2.msra.mxu0 0.0
    %219 = vmatprep.subr.mxu0 0.0
    %220 = vmatpush2.msra.mxu0 0.0
    %221 = vmatprep.subr.mxu0 0.0
    %222 = vmatpush2.msra.mxu0 0.0
    %223 = vmatprep.subr.mxu0 0.0
    %224 = vmatpush2.msra.mxu0 0.0
    %225 = vmatprep.subr.mxu0 0.0
    %226 = vmatpush2.msra.mxu0 0.0
    %227 = vmatprep.subr.mxu0 0.0
    %228 = vmatpush2.msra.mxu0 0.0
    %229 = vmatprep.subr.mxu0 0.0
    %230 = vmatpush2.msra.mxu0 0.0
    %231 = vmatprep.mubr.f32.mxu0 0.0
    %232 = vmatmul.mubr.f32.gmra.mxu0 %v162
    %v233 = vpop.f32.mrf.mxu0
    %v234 = vadd.f32 %v159, %v233
    %v235 = vpop.f32.mrf.mxu0
    %236 = vmatprep.mubr.f32.mxu0 0.0
    %237 = vmatmul.mubr.f32.gmra.mxu0 %v165
    %v238 = vpop.f32.mrf.mxu0
    %v239 = vadd.f32 %v159, %v238
    %v240 = vpop.f32.mrf.mxu0
    %241 = vdwg.mxu0
    %v242 = vmax.f32 %v234, 0.0
    %v243 = vmax.f32 %v239, 0.0
    %v244 = vld [vmem:[%s6] sm:$0x1]
    %v246 = vlaneseq
    %v247 = vshrl.u32 %v246, 7
    %v248 = vsub.s32 0, %v247
    %v249 = vrot.slane %v244, %v248
    %v251 = vmul.f32 %v242, %v249
    %v252 = vmul.f32 %v243, %v249
    %v253 = vsel %vm68, %v251, 0.0
    %254 = vadd.xlane.f32.xlu0 %v253
    %v255 = vpop.xlane.xlu0 %254
    %v256 = vsel %vm68, %v252, 0.0
    %257 = vadd.xlane.f32.xlu0 %v256
    %v258 = vpop.xlane.xlu0 %257
    %v259 = vld [vmem:[%s1] sm:$0xff]
    %v260 = vld [vmem:[%s1 + $0x8] sm:$0xff]
    %v261 = vadd.f32 %v255, %v259
    %v262 = vadd.f32 %v258, %v260
    %vm263 = vcmask 7168
    %v264 = vsel %vm263, %v261, -inf
    %v265 = vrot.slane %v264, 4
    %v266 = vmax.f32 %v264, %v265
    %v267 = vrot.slane %v266, 2
    %v268 = vmax.f32 %v266, %v267
    %v269 = vrot.slane %v268, 1
    %v270 = vmax.f32 %v268, %v269
    %v271 = vsel %vm263, %v262, -inf
    %v272 = vrot.slane %v271, 4
    %v273 = vmax.f32 %v271, %v272
    %v274 = vrot.slane %v273, 2
    %v275 = vmax.f32 %v273, %v274
    %v276 = vrot.slane %v275, 1
    %v277 = vmax.f32 %v275, %v276
    %v278 = vsub.f32 %v261, %v270
    %v279 = vsub.f32 %v262, %v277
    %v280 = vmul.f32 %v278, 1.442695
    %v281 = vpow.pop %v280
    %v282 = vmul.f32 %v279, 1.442695
    %v283 = vpow.pop %v282
    %v284 = vsel %vm263, %v281, 0.0
    %v285 = vrot.slane %v284, 4
    %v286 = vadd.f32 %v284, %v285
    %v287 = vrot.slane %v286, 2
    %v288 = vadd.f32 %v286, %v287
    %v289 = vrot.slane %v288, 1
    %v290 = vadd.f32 %v288, %v289
    %v291 = vsel %vm263, %v283, 0.0
    %v292 = vrot.slane %v291, 4
    %v293 = vadd.f32 %v291, %v292
    %v294 = vrot.slane %v293, 2
    %v295 = vadd.f32 %v293, %v294
    %v296 = vrot.slane %v295, 1
    %v297 = vadd.f32 %v295, %v296
    %v298 = vrcp.pop %v290
    %v299 = vrcp.pop %v297
    %v300 = vmul.f32 %v281, %v298
    %v301 = vmul.f32 %v283, %v299
    %303 = vset.pattern.permute.xlu0 0
    %304 = vperm.xlu0 %303, %v300
    %v305 = vpop.permute.xlu0 %304
    %308 = vset.pattern.permute.xlu0 0
    %309 = vperm.xlu0 %308, %v301
    %v310 = vpop.permute.xlu0 %309
    %v312 = vmul.f32 %v305, %v142
    %v313 = vmul.f32 %v310, %v147
    %v314 = vsel %vm68, %v312, 0.0
    %v315 = vrot.slane %v314, 4
    %v316 = vadd.f32 %v314, %v315
    %v317 = vrot.slane %v316, 2
    %v318 = vadd.f32 %v316, %v317
    %v319 = vrot.slane %v318, 1
    %v320 = vadd.f32 %v318, %v319
    %v321 = vsel %vm68, %v313, 0.0
    %v322 = vrot.slane %v321, 4
    %v323 = vadd.f32 %v321, %v322
    %v324 = vrot.slane %v323, 2
    %v325 = vadd.f32 %v323, %v324
    %v326 = vrot.slane %v325, 1
    %v327 = vadd.f32 %v325, %v326
    %v328 = vmul.f32 %v312, %v142
    %v329 = vmul.f32 %v313, %v147
    %v330 = vsel %vm68, %v328, 0.0
    %v331 = vrot.slane %v330, 4
    %v332 = vadd.f32 %v330, %v331
    %v333 = vrot.slane %v332, 2
    %v334 = vadd.f32 %v332, %v333
    %v335 = vrot.slane %v334, 1
    %v336 = vadd.f32 %v334, %v335
    %v337 = vsel %vm68, %v329, 0.0
    %v338 = vrot.slane %v337, 4
    %v339 = vadd.f32 %v337, %v338
    %v340 = vrot.slane %v339, 2
    %v341 = vadd.f32 %v339, %v340
    %v342 = vrot.slane %v341, 1
    %v343 = vadd.f32 %v341, %v342
    %v344 = vmul.f32 %v320, %v320
    %v345 = vmul.f32 %v327, %v327
    %v346 = vsub.f32 %v336, %v344
    %v347 = vsub.f32 %v343, %v345
    %v348 = vadd.f32 %v346, 1e-08
    %v349 = vadd.f32 %v347, 1e-08
    %v350 = vrsqrt.pop %v348
    %v351 = vmul.f32 %v348, %v350
    %vm352 = vcmp.eq.f32.partialorder %v348, inf
    %v353 = vsel %vm352, %v348, %v351
    %vm354 = vcmp.eq.f32.partialorder %v348, 0.0
    %v355 = vand.u32 %v348, 2147483648
    %v356 = vsel %vm354, %v355, %v353
    %v357 = vrsqrt.pop %v349
    %v358 = vmul.f32 %v349, %v357
    %vm359 = vcmp.eq.f32.partialorder %v349, inf
    %v360 = vsel %vm359, %v349, %v358
    %vm361 = vcmp.eq.f32.partialorder %v349, 0.0
    %v362 = vand.u32 %v349, 2147483648
    %v363 = vsel %vm361, %v362, %v360
    %vm364 = vcmask 1040384
    %v365 = vsel %vm364, %v320, %v356
    %v366 = vsel %vm364, %v327, %v363
    %vm367 = vcmask 254976
    %368 = vst.msk [vmem:[#allocation7] sm:$0x3] %vm367, %v365
    %369 = vst.msk [vmem:[#allocation7 + $0x2] sm:$0x3] %vm367, %v366
    // Predicated region
    $region38: #{tpu_custom_call.1} parent=1 // pred_check
      _
    $region39: #{tpu_custom_call.1} parent=1 // pred_check_branch
      %371 = sbr.rel (0) target = $region41
    $region40: #{tpu_custom_call.1} parent=1 // pred_region
      %s373 = ssub.s32 64, 64
      %374 = vsyncadd [#allocation4], %s373
      %s375 = sshll.u32 [#allocation7], 4
      %s376 = int_to_ptr.vmem [resolvable:$true] %s375
      %381 = dma.vmem_to_hbm [thread:$0]  %s376, 64, %s7, [#allocation4], 32, 32, 2
    $region41: #{tpu_custom_call.1} parent=1 // pred_fallthru
      _
    // Predicated region
    $region42: #{tpu_custom_call.1} parent=1 // pred_check
      _
    $region43: #{tpu_custom_call.1} parent=1 // pred_check_branch
      %383 = sbr.rel (0) target = $region45
    $region44: #{tpu_custom_call.1} parent=1 // pred_region
      %384 = dma.done [#allocation4], 64
    $region45: #{tpu_custom_call.1} parent=1 // pred_fallthru
      _
    %385 = vsyncpa [#allocation3], 1
    %386 = vsyncpa [#allocation6], 1
    %387 = vsyncpa [#allocation4], 1

</llo_original>
